<compile_context>
chip_gen: v7x
topology: tpu7x:2x2x1
jax: 0.10.0
libtpu: 0.0.40
codegen_flags: <defaults>
</compile_context>

<pallas_src>
import functools
import inspect

import jax
import jax.numpy as jnp
from jax.experimental import pallas as pl
from jax.experimental.pallas import tpu as pltpu

_NEG_INF = -1e30  # finite "-inf" for masking padded logit lanes


def _round_up(v, m):
    return ((v + m - 1) // m) * m


def _cdiv(a, b):
    return -(-a // b)


def _vmem_budget_bytes():
    """Per-chip VMEM budget with ~25% headroom for compiler scratch / spills."""
    cap = 128 * 1024 * 1024  # v5e/v6e physical VMEM per TensorCore
    if hasattr(pltpu, "get_tpu_info"):
        try:  # hardware query only -- never hides kernel/compile errors
            cap = int(pltpu.get_tpu_info().vmem_capacity_bytes)
        except Exception:
            pass
    return (cap * 3) // 4  # 96 MiB on v5e/v6e, 48 MiB on v7x


def _supports_pipeline_mode():
    """Explicit capability check for single-buffering grid-invariant weights."""
    if not hasattr(pl, "Buffered"):
        return False
    try:
        return "pipeline_mode" in inspect.signature(pl.BlockSpec).parameters
    except (TypeError, ValueError):
        return False


def _mlp_kernel(x_ref, w1_ref, b1_ref, w2_ref, b2_ref, o_ref, acc_ref, *,
                temperature, out_dim, out_padded):
    k = pl.program_id(1)

    @pl.when(k == 0)
    def _():
        # Initialize the logit accumulator with b2 (added exactly once).
        acc_ref[...] = jnp.broadcast_to(b2_ref[...], acc_ref.shape)

    # Hidden chunk: Linear + ReLU (MXU matmul, f32 accumulation).
    h = jnp.dot(x_ref[...], w1_ref[...], preferred_element_type=jnp.float32)
    # Cast fused with the ReLU so only a narrow (tile_n, hid_t) temp is live.
    h = jnp.maximum(h + b1_ref[...], 0.0).astype(w2_ref.dtype)
    # This hidden chunk's contribution to the logits (exact: ReLU is per-unit).
    acc_ref[...] += jnp.dot(h, w2_ref[...], preferred_element_type=jnp.float32)

    @pl.when(k == pl.num_programs(1) - 1)
    def _():
        # log_softmax(z / T) over the feature axis, stable max-shifted, all f32.
        z = acc_ref[...] * (1.0 / temperature)
        if out_padded != out_dim:
            lane = jax.lax.broadcasted_iota(jnp.int32, z.shape, dimension=1)
            valid = lane < out_dim
            z = jnp.where(valid, z, _NEG_INF)        # padded lanes -> ~-inf
        m = jnp.max(z, axis=-1, keepdims=True)
        shifted = z - m
        lse = jnp.log(jnp.sum(jnp.exp(shifted), axis=-1, keepdims=True))
        out = shifted - lse
        if out_padded != out_dim:
            out = jnp.where(valid, out, 0.0)         # keep padded lanes finite
        o_ref[...] = out.astype(o_ref.dtype)


def prepare_mlp_params(w1, b1, w2, b2, *, use_bf16=True, vmem_budget=None):
    """Pad/cast parameters ONCE (hoisted out of the per-call path).

    w1: (in_dim, hid), b1: (hid,), w2: (hid, out), b2: (out,).
    Zero-padding of feature dims is exact for both linear layers.
    """
    in_dim, hid_dim = w1.shape
    out_dim = w2.shape[1]
    assert b1.shape == (hid_dim,) and w2.shape[0] == hid_dim and b2.shape == (out_dim,)

    if vmem_budget is None:
        vmem_budget = _vmem_budget_bytes()

    mxu_dtype = jnp.bfloat16 if use_bf16 else jnp.float32
    mxu_bytes = 2 if use_bf16 else 4

    # Lane-dense padding: feature dims -> multiples of 128 (unmasked vld/vst).
    in_p = _round_up(in_dim, 128)
    hid_p = _round_up(hid_dim, 128)
    out_p = _round_up(out_dim, 128)

    # Hidden-dim (K) tiling: keep per-step weights under ~1/3 of the VMEM budget
    # so full-resident weights never blow v7x's 64 MiB and weight DMA overlaps
    # compute for large hidden dims. k_tiles == 1 for small models.
    w_bytes = (in_p + out_p) * hid_p * mxu_bytes
    k_tiles = max(1, _cdiv(w_bytes, max(vmem_budget // 3, 1)))
    hid_t = _round_up(_cdiv(hid_p, k_tiles), 128)
    k_tiles = _cdiv(hid_p, hid_t)
    hid_tp = hid_t * k_tiles

    w1_p = jnp.pad(w1.astype(mxu_dtype), ((0, in_p - in_dim), (0, hid_tp - hid_dim)))
    w2_p = jnp.pad(w2.astype(mxu_dtype), ((0, hid_tp - hid_dim), (0, out_p - out_dim)))
    b1_p = jnp.pad(b1.astype(jnp.float32), (0, hid_tp - hid_dim)).reshape(1, hid_tp)
    b2_p = jnp.pad(b2.astype(jnp.float32), (0, out_p - out_dim)).reshape(1, out_p)

    return dict(w1=w1_p, b1=b1_p, w2=w2_p, b2=b2_p,
                in_dim=in_dim, hid_dim=hid_dim, out_dim=out_dim,
                in_p=in_p, hid_t=hid_t, k_tiles=k_tiles, out_p=out_p,
                mxu_dtype=mxu_dtype, vmem_budget=vmem_budget)


def mlp_forward_prepared(x, params, *, temperature=0.2, max_batch_tile=None):
    """x: (N, in_dim) -> (N, out_dim) log_softmax((relu(x@W1+b1)@W2+b2)/T, axis=1)."""
    n, in_dim = x.shape
    assert in_dim == params["in_dim"]
    in_p = params["in_p"]
    hid_t = params["hid_t"]
    k_tiles = params["k_tiles"]
    out_p = params["out_p"]
    out_dim = params["out_dim"]
    mxu_dtype = params["mxu_dtype"]
    vmem_budget = params["vmem_budget"]

    # Balanced batch tiling: tiles are multiples of 8 sublanes (padding waste
    # < 8 rows/tile), and >=2 grid steps whenever possible so v7x's second
    # TensorCore gets work via the "parallel" batch axis.
    if max_batch_tile is None:
        max_batch_tile = 256 if vmem_budget <= 56 * 1024 * 1024 else 512
    n8 = _round_up(n, 8)
    n_tiles = max(_cdiv(n8, max_batch_tile), 2 if n8 >= 16 else 1)
    tile_n = _round_up(_cdiv(n8, n_tiles), 8)
    n_tiles = _cdiv(n8, tile_n)
    n_p = tile_n * n_tiles

    # Cast x to the MXU dtype, then pad (fast path: both are no-ops if aligned).
    x_p = x if x.dtype == mxu_dtype else x.astype(mxu_dtype)
    if (n_p, in_p) != (n, in_dim):
        x_p = jnp.pad(x_p, ((0, n_p - n), (0, in_p - in_dim)))

    kernel = functools.partial(_mlp_kernel, temperature=float(temperature),
                               out_dim=out_dim, out_padded=out_p)

    # Grid-invariant weights (k_tiles == 1) -> single-buffer them to halve their
    # resident VMEM. Explicit capability check, no broad try/except.
    wmode = {}
    if k_tiles == 1 and _supports_pipeline_mode():
        wmode = {"pipeline_mode": pl.Buffered(1)}

    out = pl.pallas_call(
        kernel,
        out_shape=jax.ShapeDtypeStruct((n_p, out_p), jnp.float32),
        grid_spec=pltpu.PrefetchScalarGridSpec(
            num_scalar_prefetch=0,
            grid=(n_tiles, k_tiles),
            in_specs=[
                pl.BlockSpec((tile_n, in_p), lambda i, k: (i, 0)),            # x tile
                pl.BlockSpec((in_p, hid_t), lambda i, k: (0, k), **wmode),    # W1 cols
                pl.BlockSpec((1, hid_t), lambda i, k: (0, k), **wmode),       # b1 chunk
                pl.BlockSpec((hid_t, out_p), lambda i, k: (k, 0), **wmode),   # W2 rows
                pl.BlockSpec((1, out_p), lambda i, k: (0, 0), **wmode),       # b2
            ],
            out_specs=pl.BlockSpec((tile_n, out_p), lambda i, k: (i, 0)),
            scratch_shapes=[pltpu.VMEM((tile_n, out_p), jnp.float32)],
        ),
        compiler_params=pltpu.CompilerParams(
            dimension_semantics=("parallel", "arbitrary"),
            vmem_limit_bytes=vmem_budget,
        ),
    )(x_p, params["w1"], params["b1"], params["w2"], params["b2"])

    return out[:n, :out_dim]


def mlp_forward(x, w1, b1, w2, b2, *, temperature=0.2, use_bf16=True,
                max_batch_tile=None):
    """Convenience one-shot wrapper (prefer prepare_mlp_params + *_prepared)."""
    params = prepare_mlp_params(w1, b1, w2, b2, use_bf16=use_bf16)
    return mlp_forward_prepared(x, params, temperature=temperature,
                                max_batch_tile=max_batch_tile)


def _init_linear(key, fan_in, fan_out):
    # Mimics PyTorch Linear default init: U(-1/sqrt(fan_in), 1/sqrt(fan_in)).
    kw, kb = jax.random.split(key)
    bound = 1.0 / jnp.sqrt(jnp.float32(fan_in))
    w = jax.random.uniform(kw, (fan_in, fan_out), jnp.float32, -bound, bound)
    b = jax.random.uniform(kb, (fan_out,), jnp.float32, -bound, bound)
    return w, b


if __name__ == "__main__":
    # Small shapes consistent with MLP(in_dim, hid_dim, out_dim).
    N, IN_DIM, HID_DIM, OUT_DIM = 16, 32, 64, 16
    T = 0.2

    key = jax.random.PRNGKey(0)
    kx, k1, k2 = jax.random.split(key, 3)

    x = jax.random.normal(kx, (N, IN_DIM), jnp.float32)
    w1, b1 = _init_linear(k1, IN_DIM, HID_DIM)
    w2, b2 = _init_linear(k2, HID_DIM, OUT_DIM)

    # Reference in plain JAX.
    h_ref = jnp.maximum(x @ w1 + b1, 0.0)
    ref = jax.nn.log_softmax((h_ref @ w2 + b2) / T, axis=1)

    # Exact-precision path (f32 on the MXU): tight tolerance.
    params_f32 = prepare_mlp_params(w1, b1, w2, b2, use_bf16=False)
    out_f32 = jax.block_until_ready(
        mlp_forward_prepared(x, params_f32, temperature=T))
    assert out_f32.shape == (N, OUT_DIM)
    assert jnp.allclose(out_f32, ref, atol=1e-5, rtol=1e-5), "f32 path mismatch"

    # Default fast path (bf16 on the MXU, f32 accumulation + f32 softmax).
    params = prepare_mlp_params(w1, b1, w2, b2)  # use_bf16=True by default
    out = jax.block_until_ready(mlp_forward_prepared(x, params, temperature=T))
    assert out.shape == (N, OUT_DIM)
    assert jnp.allclose(out, ref, atol=5e-2, rtol=0.0), "bf16 path mismatch"

    print("KERNEL_OK")
</pallas_src>

<mosaic_0001>
module attributes {stable_mosaic.version = 11 : i64} {
  func.func @_mlp_kernel(%arg0: i32, %arg1: i32, %arg2: memref<8x128xf32, #tpu.memory_space<vmem>>, %arg3: memref<128x128xf32, #tpu.memory_space<vmem>>, %arg4: memref<1x128xf32, #tpu.memory_space<vmem>>, %arg5: memref<128x128xf32, #tpu.memory_space<vmem>>, %arg6: memref<1x128xf32, #tpu.memory_space<vmem>>, %arg7: memref<8x128xf32, #tpu.memory_space<vmem>>, %arg8: memref<8x128xf32, #tpu.memory_space<vmem>>) attributes {dimension_semantics = [#tpu.dimension_semantics<parallel>, #tpu.dimension_semantics<arbitrary>], iteration_bounds = array<i64: 2, 1>, scalar_prefetch = 0 : i64, scratch_operands = 1 : i64, tpu.core_type = #tpu.core_type<tc>, window_params = [{transform_indices = @transform_0, window_bounds = array<i64: 8, 128>}, {pipeline_mode = #tpu.pipeline_mode<synchronous>, transform_indices = @transform_1, window_bounds = array<i64: 128, 128>}, {pipeline_mode = #tpu.pipeline_mode<synchronous>, transform_indices = @transform_2, window_bounds = array<i64: 1, 128>}, {pipeline_mode = #tpu.pipeline_mode<synchronous>, transform_indices = @transform_3, window_bounds = array<i64: 128, 128>}, {pipeline_mode = #tpu.pipeline_mode<synchronous>, transform_indices = @transform_4, window_bounds = array<i64: 1, 128>}, {transform_indices = @transform_5, window_bounds = array<i64: 8, 128>}]} {
    %c0_i32 = arith.constant 0 : i32
    %0 = arith.cmpi eq, %arg1, %c0_i32 : i32
    %1 = arith.extui %0 : i1 to i32
    %c0_i32_0 = arith.constant 0 : i32
    %2 = arith.cmpi ne, %1, %c0_i32_0 : i32
    scf.if %2 {
      %c0_16 = arith.constant 0 : index
      %c0_17 = arith.constant 0 : index
      %19 = vector.load %arg6[%c0_16, %c0_17] : memref<1x128xf32, #tpu.memory_space<vmem>>, vector<1x128xf32>
      %20 = vector.shape_cast %19 : vector<1x128xf32> to vector<1x128xf32>
      %21 = vector.broadcast %20 : vector<1x128xf32> to vector<8x128xf32>
      %c0_18 = arith.constant 0 : index
      %c0_19 = arith.constant 0 : index
      %22 = vector.load %arg8[%c0_18, %c0_19] : memref<8x128xf32, #tpu.memory_space<vmem>>, vector<8x128xf32>
      tpu.vector_store %arg8[%c0_18, %c0_19], %21 {strides = array<i32>} : memref<8x128xf32, #tpu.memory_space<vmem>>, vector<8x128xf32>,
    } else {
    }
    %c0 = arith.constant 0 : index
    %c0_1 = arith.constant 0 : index
    %3 = vector.load %arg2[%c0, %c0_1] : memref<8x128xf32, #tpu.memory_space<vmem>>, vector<8x128xf32>
    %c0_2 = arith.constant 0 : index
    %c0_3 = arith.constant 0 : index
    %4 = vector.load %arg3[%c0_2, %c0_3] : memref<128x128xf32, #tpu.memory_space<vmem>>, vector<128x128xf32>
    %cst = arith.constant dense<0.000000e+00> : vector<8x128xf32>
    %5 = tpu.matmul %3, %4, %cst {dimension_numbers = #tpu.dot_dimension_numbers<[1], [0], [0], [1], [0, 0, 1, 1], [], []>} : vector<8x128xf32>, vector<128x128xf32>, vector<8x128xf32> -> vector<8x128xf32>
    %c0_4 = arith.constant 0 : index
    %c0_5 = arith.constant 0 : index
    %6 = vector.load %arg4[%c0_4, %c0_5] : memref<1x128xf32, #tpu.memory_space<vmem>>, vector<1x128xf32>
    %7 = vector.broadcast %6 : vector<1x128xf32> to vector<8x128xf32>
    %8 = arith.addf %5, %7 : vector<8x128xf32>
    %cst_6 = arith.constant 0.000000e+00 : f32
    %9 = vector.broadcast %cst_6 : f32 to vector<8x128xf32>
    %10 = arith.maximumf %8, %9 : vector<8x128xf32>
    %c0_7 = arith.constant 0 : index
    %c0_8 = arith.constant 0 : index
    %11 = vector.load %arg8[%c0_7, %c0_8] : memref<8x128xf32, #tpu.memory_space<vmem>>, vector<8x128xf32>
    %c0_9 = arith.constant 0 : index
    %c0_10 = arith.constant 0 : index
    %12 = vector.load %arg5[%c0_9, %c0_10] : memref<128x128xf32, #tpu.memory_space<vmem>>, vector<128x128xf32>
    %cst_11 = arith.constant dense<0.000000e+00> : vector<8x128xf32>
    %13 = tpu.matmul %10, %12, %cst_11 {dimension_numbers = #tpu.dot_dimension_numbers<[1], [0], [0], [1], [0, 0, 1, 1], [], []>} : vector<8x128xf32>, vector<128x128xf32>, vector<8x128xf32> -> vector<8x128xf32>
    %14 = arith.addf %11, %13 : vector<8x128xf32>
    %c0_12 = arith.constant 0 : index
    %c0_13 = arith.constant 0 : index
    %15 = vector.load %arg8[%c0_12, %c0_13] : memref<8x128xf32, #tpu.memory_space<vmem>>, vector<8x128xf32>
    tpu.vector_store %arg8[%c0_12, %c0_13], %14 {strides = array<i32>} : memref<8x128xf32, #tpu.memory_space<vmem>>, vector<8x128xf32>,
    %c0_i32_14 = arith.constant 0 : i32
    %16 = arith.cmpi eq, %arg1, %c0_i32_14 : i32
    %17 = arith.extui %16 : i1 to i32
    %c0_i32_15 = arith.constant 0 : i32
    %18 = arith.cmpi ne, %17, %c0_i32_15 : i32
    scf.if %18 {
      %c0_16 = arith.constant 0 : index
      %c0_17 = arith.constant 0 : index
      %19 = vector.load %arg8[%c0_16, %c0_17] : memref<8x128xf32, #tpu.memory_space<vmem>>, vector<8x128xf32>
      %cst_18 = arith.constant 5.000000e+00 : f32
      %20 = vector.broadcast %cst_18 : f32 to vector<8x128xf32>
      %21 = arith.mulf %19, %20 : vector<8x128xf32>
      %22 = tpu.iota {dimensions = array<i32: 1>} : vector<8x128xi32>
      %c16_i32 = arith.constant 16 : i32
      %23 = vector.broadcast %c16_i32 : i32 to vector<8x128xi32>
      %24 = arith.cmpi slt, %22, %23 : vector<8x128xi32>
      %cst_19 = arith.constant -1.000000e+30 : f32
      %25 = vector.broadcast %cst_19 : f32 to vector<8x128xf32>
      %26 = arith.select %24, %21, %25 : vector<8x128xi1>, vector<8x128xf32>
      %cst_20 = arith.constant dense<0xFF800000> : vector<8xf32>
      %27 = vector.multi_reduction <maximumf>, %26, %cst_20 [1] : vector<8x128xf32> to vector<8xf32>
      %28 = vector.shape_cast %27 : vector<8xf32> to vector<8x1xf32>
      %29 = vector.broadcast %28 : vector<8x1xf32> to vector<8x128xf32>
      %30 = arith.subf %26, %29 : vector<8x128xf32>
      %31 = math.exp %30 : vector<8x128xf32>
      %cst_21 = arith.constant dense<0.000000e+00> : vector<8xf32>
      %32 = vector.multi_reduction <add>, %31, %cst_21 [1] : vector<8x128xf32> to vector<8xf32>
      %33 = vector.shape_cast %32 : vector<8xf32> to vector<8x1xf32>
      %34 = math.log %33 : vector<8x1xf32>
      %35 = vector.broadcast %34 : vector<8x1xf32> to vector<8x128xf32>
      %36 = arith.subf %30, %35 : vector<8x128xf32>
      %cst_22 = arith.constant 0.000000e+00 : f32
      %37 = vector.broadcast %cst_22 : f32 to vector<8x128xf32>
      %38 = arith.select %24, %36, %37 : vector<8x128xi1>, vector<8x128xf32>
      %c0_23 = arith.constant 0 : index
      %c0_24 = arith.constant 0 : index
      %39 = vector.load %arg7[%c0_23, %c0_24] : memref<8x128xf32, #tpu.memory_space<vmem>>, vector<8x128xf32>
      tpu.vector_store %arg7[%c0_23, %c0_24], %38 {strides = array<i32>} : memref<8x128xf32, #tpu.memory_space<vmem>>, vector<8x128xf32>,
    } else {
    }
    return
  }
  func.func @transform_0(%arg0: i32, %arg1: i32) -> (i32, i32) {
    %c0_i32 = arith.constant 0 : i32
    %c0_i32_0 = arith.constant 0 : i32
    return %arg0, %c0_i32 : i32, i32
  }
  func.func @transform_1(%arg0: i32, %arg1: i32) -> (i32, i32) {
    %c0_i32 = arith.constant 0 : i32
    %c0_i32_0 = arith.constant 0 : i32
    return %c0_i32, %arg1 : i32, i32
  }
  func.func @transform_2(%arg0: i32, %arg1: i32) -> (i32, i32) {
    %c0_i32 = arith.constant 0 : i32
    %c0_i32_0 = arith.constant 0 : i32
    return %c0_i32, %arg1 : i32, i32
  }
  func.func @transform_3(%arg0: i32, %arg1: i32) -> (i32, i32) {
    %c0_i32 = arith.constant 0 : i32
    %c0_i32_0 = arith.constant 0 : i32
    return %arg1, %c0_i32 : i32, i32
  }
  func.func @transform_4(%arg0: i32, %arg1: i32) -> (i32, i32) {
    %c0_i32 = arith.constant 0 : i32
    %c0_i32_0 = arith.constant 0 : i32
    %c0_i32_1 = arith.constant 0 : i32
    return %c0_i32, %c0_i32_0 : i32, i32
  }
  func.func @transform_5(%arg0: i32, %arg1: i32) -> (i32, i32) {
    %c0_i32 = arith.constant 0 : i32
    %c0_i32_0 = arith.constant 0 : i32
    return %arg0, %c0_i32 : i32, i32
  }
}

</mosaic_0001>

<llo_original>
// kernel: tpu_custom_call.1
$region0: #{tpu_custom_call.1}
  #allocation0 [shape = 'u32[]', space=smem, size = 0x4, offset = 0x4, fixed_abs, tag = 'smem constant byte address 0x4 - core index']
  #allocation1 [shape = 'u32[144,128]{1,0:T(1,128)}', space=vmem, size = 0x12000, scoped, tag = 'internal scratch']
  #allocation2 [shape = 'f32[8,128]{1,0:T(8,128)}', space=vmem, size = 0x1000, scoped, tag = 'scratch operand']
  %s0 = inlined_call_operand.hbm [shape: f32[16,128], index: 0, kind: input, shape index: {}]
  %s1 = inlined_call_operand.hbm [shape: f32[128,128], index: 1, kind: input, shape index: {}]
  %s2 = inlined_call_operand.hbm [shape: f32[1,128], index: 2, kind: input, shape index: {}]
  %s3 = inlined_call_operand.hbm [shape: f32[128,128], index: 3, kind: input, shape index: {}]
  %s4 = inlined_call_operand.hbm [shape: f32[1,128], index: 4, kind: input, shape index: {}]
  %s5 = inlined_call_operand.hbm [shape: f32[16,128], index: 5, kind: output, shape index: {}]
  %s6 = sld [smem:[#allocation0]]
  $region81: #{tpu_custom_call.1} parent=0
    _
  %s8 = ssub.s32 1, %s6
  %s9 = scalar_select 0, %s8, %s6
  $region1: #{tpu_custom_call.1} parent=0
    #allocation3 [shape = 'u8[8192]{0}', space=vmem, size = 0x2000, scoped, tag = 'input window, operand 0']
    #allocation4 [shape = 's32[2]{0}', space=sflag, size = 0x8, scoped, tag = 'scoped memory for tpu_custom_call.1']
    #allocation5 [shape = 's32[2]{0}', space=sflag, size = 0x8, scoped, tag = 'scoped memory for tpu_custom_call.1']
    #allocation6 [shape = 'u8[65536]{0}', space=vmem, size = 0x10000, scoped, tag = 'input window, operand 1, single buffered']
    #allocation7 [shape = 's32[1]{0}', space=sflag, size = 0x4, scoped, tag = 'scoped memory for tpu_custom_call.1']
    #allocation8 [shape = 'u8[512]{0}', space=vmem, size = 0x400, scoped, tag = 'input window, operand 2, single buffered']
    #allocation9 [shape = 'u8[65536]{0}', space=vmem, size = 0x10000, scoped, tag = 'input window, operand 3, single buffered']
    #allocation10 [shape = 's32[1]{0}', space=sflag, size = 0x4, scoped, tag = 'scoped memory for tpu_custom_call.1']
    #allocation11 [shape = 'u8[512]{0}', space=vmem, size = 0x400, scoped, tag = 'input window, operand 4, single buffered']
    #allocation12 [shape = 'u8[8192]{0}', space=vmem, size = 0x2000, scoped, tag = 'output window, operand 0']
    %10 = vsyncpa [#allocation4], 0
    %s11 = scalar_lea.sflag [#allocation4], 1
    %12 = vsyncpa %s11, 0
    %13 = vsyncpa [#allocation7], 0
    %14 = vsyncpa [#allocation10], 0
    %15 = vsyncpa [#allocation5], 0
    %s16 = scalar_lea.sflag [#allocation5], 1
    %17 = vsyncpa %s16, 0
    loop: start=0, step=1, limit=4
    $region2: #{tpu_custom_call.1} parent=1 // loop_pre_header
      _
    $region3: #{tpu_custom_call.1} parent=1 // loop_header
      %s19 = sphi 0, %s23
      %p20 = scmp.ge.s32.totalorder %s19, 4
      %s26 = sphi 0, %s38
      %s27 = sphi 0, %s34
      %s28 = sphi 0, %s26
      %s29 = sphi 0, %s27
      %s30 = sphi 0, %s28
      %s31 = sphi 0, %s29
      %s41 = sphi 0, %s43
      %s44 = sphi 0, %s41
      %s45 = sphi 0, %s44
      %s61 = sphi 0, %s45
      %s67 = sphi 0, %s69
      %s70 = sphi 0, %s67
      %s71 = sphi 0, %s70
      %s87 = sphi 0, %s71
      %s93 = sphi 0, %s95
      %s96 = sphi 0, %s93
      %s97 = sphi 0, %s96
      %s113 = sphi 0, %s97
      %s119 = sphi 0, %s121
      %s122 = sphi 0, %s119
      %s123 = sphi 0, %s122
      %s139 = sphi 0, %s123
      %s143 = sphi 0, %s143
      %s145 = sphi 0, %s143
      %s146 = sphi 0, %s145
      %s160 = sphi 0, %s146
      %s166 = sphi 0, %s168
      %s169 = sphi 0, %s166
      %s170 = sphi 0, %s169
      %s186 = sphi 0, %s170
    $region4: #{tpu_custom_call.1} parent=1 // loop_header_branch
      %22 = sbr.rel (%p20) target = $region8
    $region5: #{tpu_custom_call.1} parent=1 // loop_body
      %s24 = ssub.s32 %s19, 1
      %s25 = ssub.s32 %s19, 2
      %s32 = sadd.s32 1, %s27
      %p33 = scmp.ge.s32.totalorder %s32, 1
      %s34 = scalar_select %p33, 0, %s32
      %s35 = sadd.s32 1, %s26
      %s36 = scalar_select %p33, %s35, %s26
      %p37 = scmp.ge.s32.totalorder %s36, 2
      %s38 = scalar_select %p37, 0, %s36
      %s39 = ssub.s32 %s26, %s38
      %p40 = scmp.eq.s32.totalorder %s39, 0
      %s42 = sadd.s32 %s41, 1
      %s43 = scalar_select %p40, %s41, %s42
      %p46 = pneg %p40
      %p47 = scmp.eq.s32.totalorder %s19, 1
      %p48 = por %p46, %p47
      %p49 = scmp.ne.s32.totalorder %s41, %s44
      %p50 = scmp.eq.s32.totalorder %s19, 0
      %p51 = por %p49, %p50
      %p52 = scmp.ne.s32.totalorder %s41, %s44
      %p53 = scmp.eq.s32.totalorder %s24, 1
      %p54 = por %p52, %p53
      %p55 = scmp.ne.s32.totalorder %s44, %s45
      %p56 = scmp.eq.s32.totalorder %s24, 0
      %p57 = por %p55, %p56
      %p58 = scmp.ne.s32.totalorder %s44, %s45
      %p59 = scmp.eq.s32.totalorder %s25, 1
      %p60 = por %p58, %p59
      %p62 = scmp.ne.s32.totalorder %s45, %s61
      %p63 = scmp.eq.s32.totalorder %s25, 0
      %p64 = por %p62, %p63
      %s65 = ssub.s32 %s27, %s34
      %p66 = scmp.eq.s32.totalorder %s65, 0
      %s68 = sadd.s32 %s67, 1
      %s69 = scalar_select %p66, %s67, %s68
      %p72 = pneg %p66
      %p73 = scmp.eq.s32.totalorder %s19, 1
      %p74 = por %p72, %p73
      %p75 = scmp.ne.s32.totalorder %s67, %s70
      %p76 = scmp.eq.s32.totalorder %s19, 0
      %p77 = por %p75, %p76
      %p78 = scmp.ne.s32.totalorder %s67, %s70
      %p79 = scmp.eq.s32.totalorder %s24, 1
      %p80 = por %p78, %p79
      %p81 = scmp.ne.s32.totalorder %s70, %s71
      %p82 = scmp.eq.s32.totalorder %s24, 0
      %p83 = por %p81, %p82
      %p84 = scmp.ne.s32.totalorder %s70, %s71
      %p85 = scmp.eq.s32.totalorder %s25, 1
      %p86 = por %p84, %p85
      %p88 = scmp.ne.s32.totalorder %s71, %s87
      %p89 = scmp.eq.s32.totalorder %s25, 0
      %p90 = por %p88, %p89
      %s91 = ssub.s32 %s27, %s34
      %p92 = scmp.eq.s32.totalorder %s91, 0
      %s94 = sadd.s32 %s93, 1
      %s95 = scalar_select %p92, %s93, %s94
      %p98 = pneg %p92
      %p99 = scmp.eq.s32.totalorder %s19, 1
      %p100 = por %p98, %p99
      %p101 = scmp.ne.s32.totalorder %s93, %s96
      %p102 = scmp.eq.s32.totalorder %s19, 0
      %p103 = por %p101, %p102
      %p104 = scmp.ne.s32.totalorder %s93, %s96
      %p105 = scmp.eq.s32.totalorder %s24, 1
      %p106 = por %p104, %p105
      %p107 = scmp.ne.s32.totalorder %s96, %s97
      %p108 = scmp.eq.s32.totalorder %s24, 0
      %p109 = por %p107, %p108
      %p110 = scmp.ne.s32.totalorder %s96, %s97
      %p111 = scmp.eq.s32.totalorder %s25, 1
      %p112 = por %p110, %p111
      %p114 = scmp.ne.s32.totalorder %s97, %s113
      %p115 = scmp.eq.s32.totalorder %s25, 0
      %p116 = por %p114, %p115
      %s117 = ssub.s32 %s27, %s34
      %p118 = scmp.eq.s32.totalorder %s117, 0
      %s120 = sadd.s32 %s119, 1
      %s121 = scalar_select %p118, %s119, %s120
      %p124 = pneg %p118
      %p125 = scmp.eq.s32.totalorder %s19, 1
      %p126 = por %p124, %p125
      %p127 = scmp.ne.s32.totalorder %s119, %s122
      %p128 = scmp.eq.s32.totalorder %s19, 0
      %p129 = por %p127, %p128
      %p130 = scmp.ne.s32.totalorder %s119, %s122
      %p131 = scmp.eq.s32.totalorder %s24, 1
      %p132 = por %p130, %p131
      %p133 = scmp.ne.s32.totalorder %s122, %s123
      %p134 = scmp.eq.s32.totalorder %s24, 0
      %p135 = por %p133, %p134
      %p136 = scmp.ne.s32.totalorder %s122, %s123
      %p137 = scmp.eq.s32.totalorder %s25, 1
      %p138 = por %p136, %p137
      %p140 = scmp.ne.s32.totalorder %s123, %s139
      %p141 = scmp.eq.s32.totalorder %s25, 0
      %p142 = por %p140, %p141
      %s144 = sadd.s32 %s143, 1
      %p147 = scmp.eq.s32.totalorder %s19, 1
      %p148 = scmp.ne.s32.totalorder %s143, %s145
      %p149 = scmp.eq.s32.totalorder %s19, 0
      %p150 = por %p148, %p149
      %p151 = scmp.ne.s32.totalorder %s143, %s145
      %p152 = scmp.eq.s32.totalorder %s24, 1
      %p153 = por %p151, %p152
      %p154 = scmp.ne.s32.totalorder %s145, %s146
      %p155 = scmp.eq.s32.totalorder %s24, 0
      %p156 = por %p154, %p155
      %p157 = scmp.ne.s32.totalorder %s145, %s146
      %p158 = scmp.eq.s32.totalorder %s25, 1
      %p159 = por %p157, %p158
      %p161 = scmp.ne.s32.totalorder %s146, %s160
      %p162 = scmp.eq.s32.totalorder %s25, 0
      %p163 = por %p161, %p162
      %s164 = ssub.s32 %s26, %s38
      %p165 = scmp.eq.s32.totalorder %s164, 0
      %s167 = sadd.s32 %s166, 1
      %s168 = scalar_select %p165, %s166, %s167
      %p171 = pneg %p165
      %p172 = scmp.eq.s32.totalorder %s19, 1
      %p173 = por %p171, %p172
      %p174 = scmp.ne.s32.totalorder %s166, %s169
      %p175 = scmp.eq.s32.totalorder %s19, 0
      %p176 = por %p174, %p175
      %p177 = scmp.ne.s32.totalorder %s166, %s169
      %p178 = scmp.eq.s32.totalorder %s24, 1
      %p179 = por %p177, %p178
      %p180 = scmp.ne.s32.totalorder %s169, %s170
      %p181 = scmp.eq.s32.totalorder %s24, 0
      %p182 = por %p180, %p181
      %p183 = scmp.ne.s32.totalorder %s169, %s170
      %p184 = scmp.eq.s32.totalorder %s25, 1
      %p185 = por %p183, %p184
      %p187 = scmp.ne.s32.totalorder %s170, %s186
      %p188 = scmp.eq.s32.totalorder %s25, 0
      %p189 = por %p187, %p188
      %p190 = scmp.le.s32.totalorder 1, %s19
      %p191 = scmp.lt.s32.totalorder %s19, 3
      %p192 = pnand %p190, %p191
      %p193 = pneg %p192
      // Predicated region
      $region9: #{tpu_custom_call.1} parent=5 // pred_check
        _
      $region10: #{tpu_custom_call.1} parent=5 // pred_check_branch
        %195 = sbr.rel (%p192) target = $region12
      $region11: #{tpu_custom_call.1} parent=5 // pred_region
        %s196 = ssub.s32 %s19, 1
        // Predicated region
        $region13: #{tpu_custom_call.1} parent=11 // pred_check
          %p197 = pneg %p83
        $region14: #{tpu_custom_call.1} parent=11 // pred_check_branch
          %199 = sbr.rel (%p197) target = $region16
        $region15: #{tpu_custom_call.1} parent=11 // pred_region
          %s201 = ssub.s32 2048, 2048
          %202 = vsyncadd [#allocation7], %s201
          %s203 = smul.addr %s29, 128
          %s204 = scalar_lea.hbm %s1, %s203
          %s205 = sshll.u32 [#allocation6], 4
          %s206 = int_to_ptr.vmem [resolvable:$true] %s205
          %211 = dma.hbm_to_vmem [thread:$0]  %s204, 2048, %s206, [#allocation7], 128, 128, 8
        $region16: #{tpu_custom_call.1} parent=11 // pred_fallthru
          _
        // Predicated region
        $region17: #{tpu_custom_call.1} parent=11 // pred_check
          %p212 = pneg %p109
        $region18: #{tpu_custom_call.1} parent=11 // pred_check_branch
          %214 = sbr.rel (%p212) target = $region20
        $region19: #{tpu_custom_call.1} parent=11 // pred_region
          %s216 = ssub.s32 16, 16
          %217 = vsyncadd [#allocation7], %s216
          %s218 = smul.addr %s29, 16
          %s219 = scalar_lea.hbm %s2, %s218
          %s221 = sshll.u32 [#allocation8], 4
          %s222 = int_to_ptr.vmem [resolvable:$true] %s221
          %224 = dma.hbm_to_vmem [thread:$0]  %s219, 16, %s222, [#allocation7]
        $region20: #{tpu_custom_call.1} parent=11 // pred_fallthru
          _
        // Predicated region
        $region21: #{tpu_custom_call.1} parent=11 // pred_check
          %p225 = pneg %p135
        $region22: #{tpu_custom_call.1} parent=11 // pred_check_branch
          %227 = sbr.rel (%p225) target = $region24
        $region23: #{tpu_custom_call.1} parent=11 // pred_region
          %s228 = smul.u32 16, %s29
          %s230 = ssub.s32 2048, 2048
          %231 = vsyncadd [#allocation10], %s230
          %s232 = smul.addr %s228, 128
          %s233 = scalar_lea.hbm %s3, %s232
          %s234 = sshll.u32 [#allocation9], 4
          %s235 = int_to_ptr.vmem [resolvable:$true] %s234
          %240 = dma.hbm_to_vmem [thread:$0]  %s233, 2048, %s235, [#allocation10], 128, 128, 8
        $region24: #{tpu_custom_call.1} parent=11 // pred_fallthru
          _
        // Predicated region
        $region25: #{tpu_custom_call.1} parent=11 // pred_check
          %p241 = pneg %p156
        $region26: #{tpu_custom_call.1} parent=11 // pred_check_branch
          %243 = sbr.rel (%p241) target = $region28
        $region27: #{tpu_custom_call.1} parent=11 // pred_region
          %s245 = ssub.s32 16, 16
          %246 = vsyncadd [#allocation10], %s245
          %s248 = sshll.u32 [#allocation11], 4
          %s249 = int_to_ptr.vmem [resolvable:$true] %s248
          %251 = dma.hbm_to_vmem [thread:$0]  %s4, 16, %s249, [#allocation10]
        $region28: #{tpu_custom_call.1} parent=11 // pred_fallthru
          _
      $region12: #{tpu_custom_call.1} parent=5 // pred_fallthru
        _
      %p252 = scmp.lt.s32.totalorder %s19, 2
      // Predicated region
      $region29: #{tpu_custom_call.1} parent=5 // pred_check
        %p253 = pneg %p252
      $region30: #{tpu_custom_call.1} parent=5 // pred_check_branch
        %255 = sbr.rel (%p253) target = $region32
      $region31: #{tpu_custom_call.1} parent=5 // pred_region
        // Predicated region
        $region33: #{tpu_custom_call.1} parent=31 // pred_check
          %p256 = pneg %p51
        $region34: #{tpu_custom_call.1} parent=31 // pred_check_branch
          %258 = sbr.rel (%p256) target = $region36
        $region35: #{tpu_custom_call.1} parent=31 // pred_region
          %s259 = sand.u32 %s41, 1
          %s260 = scalar_lea.sflag [#allocation4], %s259
          %s261 = sand.u32 %s41, 1
          %s262 = smul.addr %s261, 8
          %s263 = scalar_lea.vmem [#allocation3], %s262
          %s265 = ssub.s32 128, 128
          %266 = vsyncadd %s260, %s265
          %s267 = smul.addr %s26, 128
          %s268 = scalar_lea.hbm %s0, %s267
          %s270 = sshll.u32 %s263, 4
          %s271 = int_to_ptr.vmem [resolvable:$true] %s270
          %273 = dma.hbm_to_vmem [thread:$0]  %s268, 128, %s271, %s260
        $region36: #{tpu_custom_call.1} parent=31 // pred_fallthru
          _
      $region32: #{tpu_custom_call.1} parent=5 // pred_fallthru
        _
      %p274 = scmp.le.s32.totalorder 1, %s19
      %p275 = scmp.lt.s32.totalorder %s19, 3
      %p276 = pnand %p274, %p275
      %p277 = pneg %p276
      // Predicated region
      $region37: #{tpu_custom_call.1} parent=5 // pred_check
        _
      $region38: #{tpu_custom_call.1} parent=5 // pred_check_branch
        %279 = sbr.rel (%p276) target = $region40
      $region39: #{tpu_custom_call.1} parent=5 // pred_region
        %s280 = ssub.s32 %s19, 1
        %s281 = sand.u32 %s44, 1
        %s282 = scalar_lea.sflag [#allocation4], %s281
        %s283 = sand.u32 %s44, 1
        %s284 = smul.addr %s283, 8
        %s285 = scalar_lea.vmem [#allocation3], %s284
        // Predicated region
        $region41: #{tpu_custom_call.1} parent=39 // pred_check
          %p286 = pneg %p57
        $region42: #{tpu_custom_call.1} parent=39 // pred_check_branch
          %288 = sbr.rel (%p286) target = $region44
        $region43: #{tpu_custom_call.1} parent=39 // pred_region
          %289 = dma.done %s282, 128
        $region44: #{tpu_custom_call.1} parent=39 // pred_fallthru
          _
        // Predicated region
        $region45: #{tpu_custom_call.1} parent=39 // pred_check
          %p290 = pneg %p83
        $region46: #{tpu_custom_call.1} parent=39 // pred_check_branch
          %292 = sbr.rel (%p290) target = $region48
        $region47: #{tpu_custom_call.1} parent=39 // pred_region
          %293 = dma.done [#allocation7], 2048
        $region48: #{tpu_custom_call.1} parent=39 // pred_fallthru
          _
        // Predicated region
        $region49: #{tpu_custom_call.1} parent=39 // pred_check
          %p294 = pneg %p109
        $region50: #{tpu_custom_call.1} parent=39 // pred_check_branch
          %296 = sbr.rel (%p294) target = $region52
        $region51: #{tpu_custom_call.1} parent=39 // pred_region
          %297 = dma.done [#allocation7], 16
        $region52: #{tpu_custom_call.1} parent=39 // pred_fallthru
          _
        // Predicated region
        $region53: #{tpu_custom_call.1} parent=39 // pred_check
          %p298 = pneg %p135
        $region54: #{tpu_custom_call.1} parent=39 // pred_check_branch
          %300 = sbr.rel (%p298) target = $region56
        $region55: #{tpu_custom_call.1} parent=39 // pred_region
          %301 = dma.done [#allocation10], 2048
        $region56: #{tpu_custom_call.1} parent=39 // pred_fallthru
          _
        // Predicated region
        $region57: #{tpu_custom_call.1} parent=39 // pred_check
          %p302 = pneg %p156
        $region58: #{tpu_custom_call.1} parent=39 // pred_check_branch
          %304 = sbr.rel (%p302) target = $region60
        $region59: #{tpu_custom_call.1} parent=39 // pred_region
          %305 = dma.done [#allocation10], 16
        $region60: #{tpu_custom_call.1} parent=39 // pred_fallthru
          _
        %s306 = sand.u32 %s44, 1
        %s307 = scalar_lea.sflag [#allocation4], %s306
        %s308 = sand.u32 %s44, 1
        %s309 = smul.addr %s308, 8
        %s310 = scalar_lea.vmem [#allocation3], %s309
        %p311 = pneg %p57
        %p312 = pneg %p54
        %p313 = pneg %p83
        %p314 = pneg %p80
        %p315 = pneg %p109
        %p316 = pneg %p106
        %p317 = pneg %p135
        %p318 = pneg %p132
        %p319 = pneg %p156
        %p320 = pneg %p153
        %p321 = pneg %p182
        %p322 = pneg %p179
        %s323 = sand.u32 %s169, 1
        %s324 = scalar_lea.sflag [#allocation5], %s323
        %s325 = sand.u32 %s169, 1
        %s326 = smul.addr %s325, 8
        %s327 = scalar_lea.vmem [#allocation12], %s326
        %s328 = smul.u32 16, %s29
        %p329 = scmp.eq.s32.totalorder %s29, 0
        // Predicated region
        $region61: #{tpu_custom_call.1} parent=39 // pred_check
          %p330 = pneg %p329
        $region62: #{tpu_custom_call.1} parent=39 // pred_check_branch
          %332 = sbr.rel (%p330) target = $region64
        $region63: #{tpu_custom_call.1} parent=39 // pred_region
          %v333 = vld [vmem:[#allocation11] sm:$0x1]
          %v335 = vlaneseq
          %v336 = vshrl.u32 %v335, 7
          %v337 = vsub.s32 0, %v336
          %v338 = vrot.slane %v333, %v337
          %340 = vst [vmem:[#allocation2] sm:$0xff] %v338
        $region64: #{tpu_custom_call.1} parent=39 // pred_fallthru
          _
        %v341 = vld [vmem:[%s285] sm:$0xff]
        %v342 = vld [vmem:[#allocation6] sm:$0xff]
        %v343 = vld [vmem:[#allocation6 + $0x8] sm:$0xff]
        %v344 = vld [vmem:[#allocation6 + $0x10] sm:$0xff]
        %v345 = vld [vmem:[#allocation6 + $0x18] sm:$0xff]
        %v346 = vld [vmem:[#allocation6 + $0x20] sm:$0xff]
        %v347 = vld [vmem:[#allocation6 + $0x28] sm:$0xff]
        %v348 = vld [vmem:[#allocation6 + $0x30] sm:$0xff]
        %v349 = vld [vmem:[#allocation6 + $0x38] sm:$0xff]
        %v350 = vld [vmem:[#allocation6 + $0x40] sm:$0xff]
        %v351 = vld [vmem:[#allocation6 + $0x48] sm:$0xff]
        %v352 = vld [vmem:[#allocation6 + $0x50] sm:$0xff]
        %v353 = vld [vmem:[#allocation6 + $0x58] sm:$0xff]
        %v354 = vld [vmem:[#allocation6 + $0x60] sm:$0xff]
        %v355 = vld [vmem:[#allocation6 + $0x68] sm:$0xff]
        %v356 = vld [vmem:[#allocation6 + $0x70] sm:$0xff]
        %v357 = vld [vmem:[#allocation6 + $0x78] sm:$0xff]
        %v358 = vld [vmem:[#allocation8] sm:$0x1]
        %v360 = vlaneseq
        %v361 = vshrl.u32 %v360, 7
        %v362 = vsub.s32 0, %v361
        %v363 = vrot.slane %v358, %v362
        %365 = vmatprep.subr.mxu0 0.0
        %366 = vmatpush1.msra.mxu0 %v342
        %367 = vmatprep.subr.mxu0 0.0
        %368 = vmatpush1.msra.mxu0 %v343
        %369 = vmatprep.subr.mxu0 0.0
        %370 = vmatpush1.msra.mxu0 %v344
        %371 = vmatprep.subr.mxu0 0.0
        %372 = vmatpush1.msra.mxu0 %v345
        %373 = vmatprep.subr.mxu0 0.0
        %374 = vmatpush1.msra.mxu0 %v346
        %375 = vmatprep.subr.mxu0 0.0
        %376 = vmatpush1.msra.mxu0 %v347
        %377 = vmatprep.subr.mxu0 0.0
        %378 = vmatpush1.msra.mxu0 %v348
        %379 = vmatprep.subr.mxu0 0.0
        %380 = vmatpush1.msra.mxu0 %v349
        %381 = vmatprep.subr.mxu0 0.0
        %382 = vmatpush1.msra.mxu0 %v350
        %383 = vmatprep.subr.mxu0 0.0
        %384 = vmatpush1.msra.mxu0 %v351
        %385 = vmatprep.subr.mxu0 0.0
        %386 = vmatpush1.msra.mxu0 %v352
        %387 = vmatprep.subr.mxu0 0.0
        %388 = vmatpush1.msra.mxu0 %v353
        %389 = vmatprep.subr.mxu0 0.0
        %390 = vmatpush1.msra.mxu0 %v354
        %391 = vmatprep.subr.mxu0 0.0
        %392 = vmatpush1.msra.mxu0 %v355
        %393 = vmatprep.subr.mxu0 0.0
        %394 = vmatpush1.msra.mxu0 %v356
        %395 = vmatprep.subr.mxu0 0.0
        %396 = vmatpush1.msra.mxu0 %v357
        %397 = vmatprep.subr.mxu0 0.0
        %398 = vmatpush1.msra.mxu0 0.0
        %399 = vmatprep.subr.mxu0 0.0
        %400 = vmatpush1.msra.mxu0 0.0
        %401 = vmatprep.subr.mxu0 0.0
        %402 = vmatpush1.msra.mxu0 0.0
        %403 = vmatprep.subr.mxu0 0.0
        %404 = vmatpush1.msra.mxu0 0.0
        %405 = vmatprep.subr.mxu0 0.0
        %406 = vmatpush1.msra.mxu0 0.0
        %407 = vmatprep.subr.mxu0 0.0
        %408 = vmatpush1.msra.mxu0 0.0
        %409 = vmatprep.subr.mxu0 0.0
        %410 = vmatpush1.msra.mxu0 0.0
        %411 = vmatprep.subr.mxu0 0.0
        %412 = vmatpush1.msra.mxu0 0.0
        %413 = vmatprep.subr.mxu0 0.0
        %414 = vmatpush1.msra.mxu0 0.0
        %415 = vmatprep.subr.mxu0 0.0
        %416 = vmatpush1.msra.mxu0 0.0
        %417 = vmatprep.subr.mxu0 0.0
        %418 = vmatpush1.msra.mxu0 0.0
        %419 = vmatprep.subr.mxu0 0.0
        %420 = vmatpush1.msra.mxu0 0.0
        %421 = vmatprep.subr.mxu0 0.0
        %422 = vmatpush1.msra.mxu0 0.0
        %423 = vmatprep.subr.mxu0 0.0
        %424 = vmatpush1.msra.mxu0 0.0
        %425 = vmatprep.subr.mxu0 0.0
        %426 = vmatpush1.msra.mxu0 0.0
        %427 = vmatprep.subr.mxu0 0.0
        %428 = vmatpush1.msra.mxu0 0.0
        %429 = vmatprep.mubr.f32.mxu0 0.0
        %430 = vmatmul.mubr.f32.gmra.mrb[0].mxu0 %v341
        %v431 = vpop.f32.mrb[0].mxu0
        %v432 = vadd.f32 %v363, %v431
        %v433 = vpop.f32.mrb[0].mxu0
        %434 = vdwg.mxu0
        %v435 = vmax.f32 %v432, 0.0
        %v436 = vld [vmem:[#allocation2] sm:$0xff]
        %v437 = vld [vmem:[#allocation9] sm:$0xff]
        %v438 = vld [vmem:[#allocation9 + $0x8] sm:$0xff]
        %v439 = vld [vmem:[#allocation9 + $0x10] sm:$0xff]
        %v440 = vld [vmem:[#allocation9 + $0x18] sm:$0xff]
        %v441 = vld [vmem:[#allocation9 + $0x20] sm:$0xff]
        %v442 = vld [vmem:[#allocation9 + $0x28] sm:$0xff]
        %v443 = vld [vmem:[#allocation9 + $0x30] sm:$0xff]
        %v444 = vld [vmem:[#allocation9 + $0x38] sm:$0xff]
        %v445 = vld [vmem:[#allocation9 + $0x40] sm:$0xff]
        %v446 = vld [vmem:[#allocation9 + $0x48] sm:$0xff]
        %v447 = vld [vmem:[#allocation9 + $0x50] sm:$0xff]
        %v448 = vld [vmem:[#allocation9 + $0x58] sm:$0xff]
        %v449 = vld [vmem:[#allocation9 + $0x60] sm:$0xff]
        %v450 = vld [vmem:[#allocation9 + $0x68] sm:$0xff]
        %v451 = vld [vmem:[#allocation9 + $0x70] sm:$0xff]
        %v452 = vld [vmem:[#allocation9 + $0x78] sm:$0xff]
        %453 = vmatprep.subr.mxu0 0.0
        %454 = vmatpush1.msra.mxu0 %v437
        %455 = vmatprep.subr.mxu0 0.0
        %456 = vmatpush1.msra.mxu0 %v438
        %457 = vmatprep.subr.mxu0 0.0
        %458 = vmatpush1.msra.mxu0 %v439
        %459 = vmatprep.subr.mxu0 0.0
        %460 = vmatpush1.msra.mxu0 %v440
        %461 = vmatprep.subr.mxu0 0.0
        %462 = vmatpush1.msra.mxu0 %v441
        %463 = vmatprep.subr.mxu0 0.0
        %464 = vmatpush1.msra.mxu0 %v442
        %465 = vmatprep.subr.mxu0 0.0
        %466 = vmatpush1.msra.mxu0 %v443
        %467 = vmatprep.subr.mxu0 0.0
        %468 = vmatpush1.msra.mxu0 %v444
        %469 = vmatprep.subr.mxu0 0.0
        %470 = vmatpush1.msra.mxu0 %v445
        %471 = vmatprep.subr.mxu0 0.0
        %472 = vmatpush1.msra.mxu0 %v446
        %473 = vmatprep.subr.mxu0 0.0
        %474 = vmatpush1.msra.mxu0 %v447
        %475 = vmatprep.subr.mxu0 0.0
        %476 = vmatpush1.msra.mxu0 %v448
        %477 = vmatprep.subr.mxu0 0.0
        %478 = vmatpush1.msra.mxu0 %v449
        %479 = vmatprep.subr.mxu0 0.0
        %480 = vmatpush1.msra.mxu0 %v450
        %481 = vmatprep.subr.mxu0 0.0
        %482 = vmatpush1.msra.mxu0 %v451
        %483 = vmatprep.subr.mxu0 0.0
        %484 = vmatpush1.msra.mxu0 %v452
        %485 = vmatprep.subr.mxu0 0.0
        %486 = vmatpush1.msra.mxu0 0.0
        %487 = vmatprep.subr.mxu0 0.0
        %488 = vmatpush1.msra.mxu0 0.0
        %489 = vmatprep.subr.mxu0 0.0
        %490 = vmatpush1.msra.mxu0 0.0
        %491 = vmatprep.subr.mxu0 0.0
        %492 = vmatpush1.msra.mxu0 0.0
        %493 = vmatprep.subr.mxu0 0.0
        %494 = vmatpush1.msra.mxu0 0.0
        %495 = vmatprep.subr.mxu0 0.0
        %496 = vmatpush1.msra.mxu0 0.0
        %497 = vmatprep.subr.mxu0 0.0
        %498 = vmatpush1.msra.mxu0 0.0
        %499 = vmatprep.subr.mxu0 0.0
        %500 = vmatpush1.msra.mxu0 0.0
        %501 = vmatprep.subr.mxu0 0.0
        %502 = vmatpush1.msra.mxu0 0.0
        %503 = vmatprep.subr.mxu0 0.0
        %504 = vmatpush1.msra.mxu0 0.0
        %505 = vmatprep.subr.mxu0 0.0
        %506 = vmatpush1.msra.mxu0 0.0
        %507 = vmatprep.subr.mxu0 0.0
        %508 = vmatpush1.msra.mxu0 0.0
        %509 = vmatprep.subr.mxu0 0.0
        %510 = vmatpush1.msra.mxu0 0.0
        %511 = vmatprep.subr.mxu0 0.0
        %512 = vmatpush1.msra.mxu0 0.0
        %513 = vmatprep.subr.mxu0 0.0
        %514 = vmatpush1.msra.mxu0 0.0
        %515 = vmatprep.subr.mxu0 0.0
        %516 = vmatpush1.msra.mxu0 0.0
        %517 = vmatprep.mubr.f32.mxu0 0.0
        %518 = vmatmul.mubr.f32.gmra.mrb[0].mxu0 %v435
        %v519 = vpop.f32.mrb[0].mxu0
        %v520 = vadd.f32 0.0, %v519
        %v521 = vpop.f32.mrb[0].mxu0
        %522 = vdwg.mxu0
        %v523 = vadd.f32 %v436, %v520
        %524 = vst [vmem:[#allocation2] sm:$0xff] %v523
        // Predicated region
        $region65: #{tpu_custom_call.1} parent=39 // pred_check
          %p525 = pneg %p329
        $region66: #{tpu_custom_call.1} parent=39 // pred_check_branch
          %527 = sbr.rel (%p525) target = $region68
        $region67: #{tpu_custom_call.1} parent=39 // pred_region
          %v528 = vld [vmem:[#allocation2] sm:$0xff]
          %v529 = vmul.f32 %v528, 5.0
          %v530 = vlaneseq
          %v531 = vand.u32 %v530, 127
          %vm532 = vcmp.lt.s32.totalorder %v531, 16
          %v533 = vsel %vm532, %v529, -1e+30
          %534 = vmax.xlane.f32.xlu0 %v533
          %v535 = vpop.xlane.xlu0 %534
          %v536 = vsub.f32 %v533, %v535
          %v537 = vmul.f32 %v536, 1.442695
          %v538 = vpow.pop %v537
          %539 = vadd.xlane.f32.xlu0 %v538
          %v540 = vpop.xlane.xlu0 %539
          %v541 = vlog2.pop %v540
          %v542 = vmul.f32 %v541, 0.6931472
          %v543 = vsub.f32 %v536, %v542
          %v544 = vsel %vm532, %v543, 0.0
          %545 = vst [vmem:[%s327] sm:$0xff] %v544
        $region68: #{tpu_custom_call.1} parent=39 // pred_fallthru
          _
        %s546 = sand.u32 %s169, 1
        %s547 = scalar_lea.sflag [#allocation5], %s546
        %s548 = sand.u32 %s169, 1
        %s549 = smul.addr %s548, 8
        %s550 = scalar_lea.vmem [#allocation12], %s549
        // Predicated region
        $region69: #{tpu_custom_call.1} parent=39 // pred_check
          %p551 = pneg %p179
        $region70: #{tpu_custom_call.1} parent=39 // pred_check_branch
          %553 = sbr.rel (%p551) target = $region72
        $region71: #{tpu_custom_call.1} parent=39 // pred_region
          %s555 = ssub.s32 128, 128
          %556 = vsyncadd %s547, %s555
          %s557 = smul.addr %s28, 128
          %s558 = scalar_lea.hbm %s5, %s557
          %s560 = sshll.u32 %s550, 4
          %s561 = int_to_ptr.vmem [resolvable:$true] %s560
          %563 = dma.vmem_to_hbm [thread:$0]  %s561, 128, %s558, %s547
        $region72: #{tpu_custom_call.1} parent=39 // pred_fallthru
          _
      $region40: #{tpu_custom_call.1} parent=5 // pred_fallthru
        _
      %p564 = scmp.le.s32.totalorder 2, %s19
      // Predicated region
      $region73: #{tpu_custom_call.1} parent=5 // pred_check
        %p565 = pneg %p564
      $region74: #{tpu_custom_call.1} parent=5 // pred_check_branch
        %567 = sbr.rel (%p565) target = $region76
      $region75: #{tpu_custom_call.1} parent=5 // pred_region
        %s568 = ssub.s32 %s19, 2
        // Predicated region
        $region77: #{tpu_custom_call.1} parent=75 // pred_check
          %p569 = pneg %p185
        $region78: #{tpu_custom_call.1} parent=75 // pred_check_branch
          %571 = sbr.rel (%p569) target = $region80
        $region79: #{tpu_custom_call.1} parent=75 // pred_region
          %s572 = sand.u32 %s170, 1
          %s573 = scalar_lea.sflag [#allocation5], %s572
          %s574 = sand.u32 %s170, 1
          %s575 = smul.addr %s574, 8
          %s576 = scalar_lea.vmem [#allocation12], %s575
          %577 = dma.done %s573, 128
        $region80: #{tpu_custom_call.1} parent=75 // pred_fallthru
          _
      $region76: #{tpu_custom_call.1} parent=5 // pred_fallthru
        _
    $region6: #{tpu_custom_call.1} parent=1 // loop_footer
      %s23 = sadd.s32 1, %s19
    $region7: #{tpu_custom_call.1} parent=1 // loop_footer_branch
      %18 = sbr.rel target = $region3
    $region8: #{tpu_custom_call.1} parent=1 // loop_exit
      _
    %578 = vsyncpa [#allocation4], 1
    %s579 = scalar_lea.sflag [#allocation4], 1
    %580 = vsyncpa %s579, 1
    %581 = vsyncpa [#allocation7], 1
    %582 = vsyncpa [#allocation10], 1
    %583 = vsyncpa [#allocation5], 1
    %s584 = scalar_lea.sflag [#allocation5], 1
    %585 = vsyncpa %s584, 1

</llo_original>
